<compile_context>
chip_gen: v5e
topology: v5e:2x2
jax: 0.10.0
libtpu: 0.0.40
codegen_flags: <defaults>
</compile_context>

<pallas_src>
import jax
import jax.numpy as jnp
from jax import lax
from jax.experimental import pallas as pl
from jax.experimental.pallas import tpu as pltpu

MARGIN = 0.5
LAMBDA_TRIPLET = 1.0
EPS = 1e-8  # matches torch.nn.functional.cosine_similarity default eps


def _triplet_math(a, p, n, base, tile_b, nvalid):
    """Vectorized f32 cosine-triplet math; padded rows masked to 0. Returns tile sum."""
    aa = jnp.sum(a * a, axis=1, keepdims=True)   # [TB, 1]
    pp = jnp.sum(p * p, axis=1, keepdims=True)
    nn = jnp.sum(n * n, axis=1, keepdims=True)
    ap = jnp.sum(a * p, axis=1, keepdims=True)
    an = jnp.sum(a * n, axis=1, keepdims=True)

    eps = jnp.float32(EPS)
    na = jnp.maximum(jnp.sqrt(aa), eps)          # per-norm clamp, like PyTorch
    npn = jnp.maximum(jnp.sqrt(pp), eps)
    nnn = jnp.maximum(jnp.sqrt(nn), eps)
    pos_sim = ap / (na * npn)                    # cos(a, p)
    neg_sim = an / (na * nnn)                    # cos(a, n)

    # pos_d - neg_d + margin = (1 - pos_sim) - (1 - neg_sim) + margin
    per_triplet = jnp.maximum(neg_sim - pos_sim + jnp.float32(MARGIN), 0.0)

    rows = base + lax.broadcasted_iota(jnp.int32, (tile_b, 1), 0)
    per_triplet = jnp.where(rows < nvalid, per_triplet, 0.0)
    return jnp.sum(per_triplet)


def _make_resident_kernel(tile_b: int):
    """Primary path: embedding table resident in VMEM, gather via in-VMEM row copies."""

    def kernel(ai_ref, pi_ref, ni_ref, nvalid_ref,   # scalar-prefetch (SMEM)
               emb_ref,                              # full table, VMEM-resident
               out_ref,                              # output: (1, 8, 128) partial
               a_buf, p_buf, n_buf):                 # VMEM scratch (tile_b, D)
        t = pl.program_id(0)
        base = t * tile_b
        nv = nvalid_ref[0]

        # In-VMEM gather: dynamic-row slices of the resident table.
        # (Padded rows gather index 0 and are masked out of the loss below.)
        @pl.loop(0, tile_b)
        def _gather(r):
            a_buf[pl.ds(r, 1), :] = emb_ref[pl.ds(ai_ref[base + r], 1), :]
            p_buf[pl.ds(r, 1), :] = emb_ref[pl.ds(pi_ref[base + r], 1), :]
            n_buf[pl.ds(r, 1), :] = emb_ref[pl.ds(ni_ref[base + r], 1), :]

        partial = _triplet_math(
            a_buf[...].astype(jnp.float32),
            p_buf[...].astype(jnp.float32),
            n_buf[...].astype(jnp.float32),
            base, tile_b, nv)

        # Lane-dense, unmasked (8,128) store; wrapper reads [t, 0, 0].
        out_ref[...] = jnp.full((1, 8, 128), partial, dtype=jnp.float32)

    return kernel


def _make_hbm_gather_kernel(tile_b: int):
    """Fallback path for tables too large for VMEM: per-row HBM DMA gather."""

    def kernel(ai_ref, pi_ref, ni_ref, nvalid_ref,   # scalar-prefetch (SMEM)
               emb_ref,                              # embeddings in HBM (ANY)
               out_ref,                              # output: (1, 8, 128) partial
               a_buf, p_buf, n_buf, sems):           # scratch
        t = pl.program_id(0)
        base = t * tile_b
        nv = nvalid_ref[0]          # read SMEM scalars before any DMA wait

        def row_copy(which, buf, row_idx, r):
            # (1, D) row DMA: embeddings[row_idx] -> buf[r]; shared sem per stream.
            return pltpu.make_async_copy(
                emb_ref.at[pl.ds(row_idx, 1)],
                buf.at[pl.ds(r, 1)],
                sems.at[which],
            )

        # Issue gathers only for valid (non-padded) rows of this tile.
        @pl.loop(0, tile_b)
        def _issue(r):
            @pl.when(base + r < nv)
            def _():
                row_copy(0, a_buf, ai_ref[base + r], r).start()
                row_copy(1, p_buf, pi_ref[base + r], r).start()
                row_copy(2, n_buf, ni_ref[base + r], r).start()

        # Wait for exactly the copies that were issued (same predicate).
        @pl.loop(0, tile_b)
        def _wait(r):
            @pl.when(base + r < nv)
            def _():
                row_copy(0, a_buf, 0, r).wait()
                row_copy(1, p_buf, 0, r).wait()
                row_copy(2, n_buf, 0, r).wait()

        partial = _triplet_math(
            a_buf[...].astype(jnp.float32),
            p_buf[...].astype(jnp.float32),
            n_buf[...].astype(jnp.float32),
            base, tile_b, nv)

        out_ref[...] = jnp.full((1, 8, 128), partial, dtype=jnp.float32)

    return kernel


def triplet_loss(embeddings, anchor_idx, positive_idx, negative_idx, *,
                 tile_b=None, force_hbm_gather=False):
    """Forward of TripletLoss(margin=0.5, reduction='mean', lambda=1.0, cosine)."""
    embeddings = jnp.asarray(embeddings)
    num_nodes, emb_dim = embeddings.shape
    batch = int(anchor_idx.shape[0])
    itemsize = jnp.dtype(embeddings.dtype).itemsize
    table_bytes = num_nodes * emb_dim * itemsize

    # --- residency decision (generation aware) -------------------------------
    try:
        vmem_cap = int(pltpu.get_tpu_info().vmem_capacity_bytes)
    except Exception:
        vmem_cap = 64 << 20  # v7x worst case
    # 2x table (possible double-buffering) + scratch/headroom must fit.
    resident = (not force_hbm_gather) and (2 * table_bytes + (8 << 20) <= int(vmem_cap * 0.8))

    # --- tile size heuristic --------------------------------------------------
    if tile_b is None:
        if resident:
            # Large tiles amortize per-grid-step overhead; keep >=2 tiles when
            # the batch allows it so v7x's two TensorCores both get work.
            target = max(8, -(-batch // 2))              # ceil(batch / 2)
            tile_b = min(512, ((target + 7) // 8) * 8)
        else:
            tile_b = 64                                  # bounds DMA fan-out
    tile_b = max(8, ((int(tile_b) + 7) // 8) * 8)
    tile_b = min(tile_b, ((batch + 7) // 8) * 8)

    num_tiles = pl.cdiv(batch, tile_b)
    padded = num_tiles * tile_b
    pad = padded - batch

    def prep(idx):
        idx = jnp.asarray(idx, jnp.int32)
        if pad:
            idx = jnp.pad(idx, (0, pad))   # padded rows gather row 0, masked out
        return idx

    ai = prep(anchor_idx)
    pi = prep(positive_idx)
    ni = prep(negative_idx)
    nvalid = jnp.array([batch], jnp.int32)

    scratch = [
        pltpu.VMEM((tile_b, emb_dim), embeddings.dtype),  # anchor rows
        pltpu.VMEM((tile_b, emb_dim), embeddings.dtype),  # positive rows
        pltpu.VMEM((tile_b, emb_dim), embeddings.dtype),  # negative rows
    ]

    if resident:
        kernel = _make_resident_kernel(tile_b)
        # Full-array block, constant index_map -> table stays resident in VMEM.
        emb_spec = pl.BlockSpec((num_nodes, emb_dim),
                                lambda t, ai, pi, ni, nb: (0, 0))
    else:
        kernel = _make_hbm_gather_kernel(tile_b)
        emb_spec = pl.BlockSpec(memory_space=pl.ANY)      # stays in HBM
        scratch.append(pltpu.SemaphoreType.DMA((3,)))

    vmem_limit = None
    if resident:
        need = 2 * table_bytes + 3 * tile_b * emb_dim * itemsize + (4 << 20)
        if need > (32 << 20):
            vmem_limit = int(min(need, vmem_cap * 0.9))

    partials = pl.pallas_call(
        kernel,
        out_shape=jax.ShapeDtypeStruct((num_tiles, 8, 128), jnp.float32),
        grid_spec=pltpu.PrefetchScalarGridSpec(
            num_scalar_prefetch=4,
            grid=(num_tiles,),
            in_specs=[emb_spec],
            out_specs=pl.BlockSpec(
                (1, 8, 128), lambda t, ai, pi, ni, nb: (t, 0, 0)),
            scratch_shapes=scratch,
        ),
        compiler_params=pltpu.CompilerParams(
            dimension_semantics=("parallel",),
            vmem_limit_bytes=vmem_limit,
        ),
    )(ai, pi, ni, nvalid, embeddings)

    total = jnp.sum(partials[:, 0, 0])
    return LAMBDA_TRIPLET * (total / batch)


def _reference_triplet_loss(embeddings, ai, pi, ni):
    """Plain-JAX mirror of the PyTorch module (for correctness checking)."""
    a, p, n = embeddings[ai], embeddings[pi], embeddings[ni]

    def cos_sim(x, y):
        nx = jnp.maximum(jnp.linalg.norm(x, axis=1), EPS)
        ny = jnp.maximum(jnp.linalg.norm(y, axis=1), EPS)
        return jnp.sum(x * y, axis=1) / (nx * ny)

    pos_d = 1.0 - cos_sim(a, p)
    neg_d = 1.0 - cos_sim(a, n)
    loss = jnp.maximum(pos_d - neg_d + MARGIN, 0.0)
    return LAMBDA_TRIPLET * jnp.mean(loss)


if __name__ == "__main__":
    key = jax.random.PRNGKey(0)
    k_emb, k_a, k_p, k_n = jax.random.split(key, 4)

    num_nodes, embedding_dim = 32, 128
    embeddings = jax.random.normal(k_emb, (num_nodes, embedding_dim), dtype=jnp.float32)

    # Case 1: single tile, resident-table gather.
    b1 = 8
    a1 = jax.random.randint(k_a, (b1,), 0, num_nodes)
    p1 = jax.random.randint(k_p, (b1,), 0, num_nodes)
    n1 = jax.random.randint(k_n, (b1,), 0, num_nodes)
    loss1 = triplet_loss(embeddings, a1, p1, n1)
    jax.block_until_ready(loss1)
    ref1 = _reference_triplet_loss(embeddings, a1, p1, n1)
    assert jnp.allclose(loss1, ref1, atol=1e-5, rtol=1e-5), (loss1, ref1)

    # Case 2: multiple tiles + padded last tile, resident-table gather.
    b2 = 20
    k_a2, k_p2, k_n2 = jax.random.split(k_a, 3)
    a2 = jax.random.randint(k_a2, (b2,), 0, num_nodes)
    p2 = jax.random.randint(k_p2, (b2,), 0, num_nodes)
    n2 = jax.random.randint(k_n2, (b2,), 0, num_nodes)
    loss2 = triplet_loss(embeddings, a2, p2, n2)
    jax.block_until_ready(loss2)
    ref2 = _reference_triplet_loss(embeddings, a2, p2, n2)
    assert jnp.allclose(loss2, ref2, atol=1e-5, rtol=1e-5), (loss2, ref2)

    # Case 3: manual-DMA HBM gather fallback (tables that don't fit VMEM),
    # multi-tile with padded tail to exercise the pl.when DMA guards.
    loss3 = triplet_loss(embeddings, a2, p2, n2, tile_b=16, force_hbm_gather=True)
    jax.block_until_ready(loss3)
    assert jnp.allclose(loss3, ref2, atol=1e-5, rtol=1e-5), (loss3, ref2)

    print("KERNEL_OK")
</pallas_src>

<mosaic_0001>
module attributes {stable_mosaic.version = 11 : i64} {
  func.func @kernel(%arg0: i32, %arg1: memref<8xi32, #tpu.memory_space<smem>>, %arg2: memref<8xi32, #tpu.memory_space<smem>>, %arg3: memref<8xi32, #tpu.memory_space<smem>>, %arg4: memref<1xi32, #tpu.memory_space<smem>>, %arg5: memref<32x128xf32, #tpu.memory_space<vmem>>, %arg6: memref<1x8x128xf32, #tpu.memory_space<vmem>>, %arg7: memref<8x128xf32, #tpu.memory_space<vmem>>, %arg8: memref<8x128xf32, #tpu.memory_space<vmem>>, %arg9: memref<8x128xf32, #tpu.memory_space<vmem>>) attributes {dimension_semantics = [#tpu.dimension_semantics<parallel>], iteration_bounds = array<i64: 1>, scalar_prefetch = 4 : i64, scratch_operands = 3 : i64, tpu.core_type = #tpu.core_type<tc>, window_params = [{pipeline_mode = #tpu.pipeline_mode<synchronous>, transform_indices = @transform_0, window_bounds = array<i64: 32, 128>}, {transform_indices = @transform_1, window_bounds = array<i64: 1, 8, 128>}]} {
    %c8_i32 = arith.constant 8 : i32
    %0 = arith.muli %arg0, %c8_i32 : i32
    %c0 = arith.constant 0 : index
    %1 = memref.load %arg4[%c0] : memref<1xi32, #tpu.memory_space<smem>>
    %c0_i32 = arith.constant 0 : i32
    %c8_i32_0 = arith.constant 8 : i32
    %2 = arith.addi %c0_i32, %c8_i32_0 : i32
    %c1_i32 = arith.constant 1 : i32
    scf.for %arg10 = %c0_i32 to %2 step %c1_i32  : i32 {
      %c1_i32_22 = arith.constant 1 : i32
      %52 = arith.muli %arg10, %c1_i32_22 : i32
      %c0_i32_23 = arith.constant 0 : i32
      %53 = arith.addi %c0_i32_23, %52 : i32
      %54 = arith.addi %0, %53 : i32
      %55 = arith.index_cast %54 : i32 to index
      %56 = memref.load %arg1[%55] : memref<8xi32, #tpu.memory_space<smem>>
      %57 = arith.index_cast %56 : i32 to index
      %c0_24 = arith.constant 0 : index
      %58 = vector.load %arg5[%57, %c0_24] : memref<32x128xf32, #tpu.memory_space<vmem>>, vector<1x128xf32>
      %59 = arith.index_cast %53 : i32 to index
      %c0_25 = arith.constant 0 : index
      %60 = vector.load %arg7[%59, %c0_25] : memref<8x128xf32, #tpu.memory_space<vmem>>, vector<1x128xf32>
      tpu.vector_store %arg7[%59, %c0_25], %58 {strides = array<i32>} : memref<8x128xf32, #tpu.memory_space<vmem>>, vector<1x128xf32>,
      %61 = arith.addi %0, %53 : i32
      %62 = arith.index_cast %61 : i32 to index
      %63 = memref.load %arg2[%62] : memref<8xi32, #tpu.memory_space<smem>>
      %64 = arith.index_cast %63 : i32 to index
      %c0_26 = arith.constant 0 : index
      %65 = vector.load %arg5[%64, %c0_26] : memref<32x128xf32, #tpu.memory_space<vmem>>, vector<1x128xf32>
      %66 = arith.index_cast %53 : i32 to index
      %c0_27 = arith.constant 0 : index
      %67 = vector.load %arg8[%66, %c0_27] : memref<8x128xf32, #tpu.memory_space<vmem>>, vector<1x128xf32>
      tpu.vector_store %arg8[%66, %c0_27], %65 {strides = array<i32>} : memref<8x128xf32, #tpu.memory_space<vmem>>, vector<1x128xf32>,
      %68 = arith.addi %0, %53 : i32
      %69 = arith.index_cast %68 : i32 to index
      %70 = memref.load %arg3[%69] : memref<8xi32, #tpu.memory_space<smem>>
      %71 = arith.index_cast %70 : i32 to index
      %c0_28 = arith.constant 0 : index
      %72 = vector.load %arg5[%71, %c0_28] : memref<32x128xf32, #tpu.memory_space<vmem>>, vector<1x128xf32>
      %73 = arith.index_cast %53 : i32 to index
      %c0_29 = arith.constant 0 : index
      %74 = vector.load %arg9[%73, %c0_29] : memref<8x128xf32, #tpu.memory_space<vmem>>, vector<1x128xf32>
      tpu.vector_store %arg9[%73, %c0_29], %72 {strides = array<i32>} : memref<8x128xf32, #tpu.memory_space<vmem>>, vector<1x128xf32>,
    }
    %c8_i32_1 = arith.constant 8 : i32
    %c0_2 = arith.constant 0 : index
    %c0_3 = arith.constant 0 : index
    %3 = vector.load %arg7[%c0_2, %c0_3] : memref<8x128xf32, #tpu.memory_space<vmem>>, vector<8x128xf32>
    %c0_4 = arith.constant 0 : index
    %c0_5 = arith.constant 0 : index
    %4 = vector.load %arg8[%c0_4, %c0_5] : memref<8x128xf32, #tpu.memory_space<vmem>>, vector<8x128xf32>
    %c0_6 = arith.constant 0 : index
    %c0_7 = arith.constant 0 : index
    %5 = vector.load %arg9[%c0_6, %c0_7] : memref<8x128xf32, #tpu.memory_space<vmem>>, vector<8x128xf32>
    %6 = arith.mulf %3, %3 : vector<8x128xf32>
    %cst = arith.constant dense<0.000000e+00> : vector<8xf32>
    %7 = vector.multi_reduction <add>, %6, %cst [1] : vector<8x128xf32> to vector<8xf32>
    %8 = vector.shape_cast %7 : vector<8xf32> to vector<8x1xf32>
    %9 = arith.mulf %4, %4 : vector<8x128xf32>
    %cst_8 = arith.constant dense<0.000000e+00> : vector<8xf32>
    %10 = vector.multi_reduction <add>, %9, %cst_8 [1] : vector<8x128xf32> to vector<8xf32>
    %11 = vector.shape_cast %10 : vector<8xf32> to vector<8x1xf32>
    %12 = arith.mulf %5, %5 : vector<8x128xf32>
    %cst_9 = arith.constant dense<0.000000e+00> : vector<8xf32>
    %13 = vector.multi_reduction <add>, %12, %cst_9 [1] : vector<8x128xf32> to vector<8xf32>
    %14 = vector.shape_cast %13 : vector<8xf32> to vector<8x1xf32>
    %15 = arith.mulf %3, %4 : vector<8x128xf32>
    %cst_10 = arith.constant dense<0.000000e+00> : vector<8xf32>
    %16 = vector.multi_reduction <add>, %15, %cst_10 [1] : vector<8x128xf32> to vector<8xf32>
    %17 = vector.shape_cast %16 : vector<8xf32> to vector<8x1xf32>
    %18 = arith.mulf %3, %5 : vector<8x128xf32>
    %cst_11 = arith.constant dense<0.000000e+00> : vector<8xf32>
    %19 = vector.multi_reduction <add>, %18, %cst_11 [1] : vector<8x128xf32> to vector<8xf32>
    %20 = vector.shape_cast %19 : vector<8xf32> to vector<8x1xf32>
    %21 = math.sqrt %8 : vector<8x1xf32>
    %cst_12 = arith.constant 9.99999993E-9 : f32
    %22 = vector.broadcast %cst_12 : f32 to vector<8x1xf32>
    %23 = arith.maximumf %21, %22 : vector<8x1xf32>
    %24 = math.sqrt %11 : vector<8x1xf32>
    %cst_13 = arith.constant 9.99999993E-9 : f32
    %25 = vector.broadcast %cst_13 : f32 to vector<8x1xf32>
    %26 = arith.maximumf %24, %25 : vector<8x1xf32>
    %27 = math.sqrt %14 : vector<8x1xf32>
    %cst_14 = arith.constant 9.99999993E-9 : f32
    %28 = vector.broadcast %cst_14 : f32 to vector<8x1xf32>
    %29 = arith.maximumf %27, %28 : vector<8x1xf32>
    %30 = arith.mulf %23, %26 : vector<8x1xf32>
    %31 = arith.divf %17, %30 : vector<8x1xf32>
    %32 = arith.mulf %23, %29 : vector<8x1xf32>
    %33 = arith.divf %20, %32 : vector<8x1xf32>
    %34 = arith.subf %33, %31 : vector<8x1xf32>
    %cst_15 = arith.constant 5.000000e-01 : f32
    %35 = vector.broadcast %cst_15 : f32 to vector<8x1xf32>
    %36 = arith.addf %34, %35 : vector<8x1xf32>
    %cst_16 = arith.constant 0.000000e+00 : f32
    %37 = vector.broadcast %cst_16 : f32 to vector<8x1xf32>
    %38 = arith.maximumf %36, %37 : vector<8x1xf32>
    %39 = tpu.iota {dimensions = array<i32: 0>} : vector<8x1xi32>
    %40 = vector.broadcast %0 : i32 to vector<8x1xi32>
    %41 = arith.addi %40, %39 : vector<8x1xi32>
    %42 = vector.broadcast %1 : i32 to vector<8x1xi32>
    %43 = arith.cmpi slt, %41, %42 : vector<8x1xi32>
    %cst_17 = arith.constant 0.000000e+00 : f32
    %44 = vector.broadcast %cst_17 : f32 to vector<8x1xf32>
    %45 = arith.select %43, %38, %44 : vector<8x1xi1>, vector<8x1xf32>
    %46 = vector.shape_cast %45 : vector<8x1xf32> to vector<1x8x1xf32>
    %cst_18 = arith.constant dense<0.000000e+00> : vector<1xf32>
    %47 = vector.multi_reduction <add>, %46, %cst_18 [1, 2] : vector<1x8x1xf32> to vector<1xf32>
    %48 = vector.shape_cast %47 : vector<1xf32> to vector<1x1x1xf32>
    %49 = vector.extract %48[0, 0, 0] : f32 from vector<1x1x1xf32>
    %50 = vector.broadcast %49 : f32 to vector<1x8x128xf32>
    %c0_19 = arith.constant 0 : index
    %c0_20 = arith.constant 0 : index
    %c0_21 = arith.constant 0 : index
    %51 = vector.load %arg6[%c0_19, %c0_20, %c0_21] : memref<1x8x128xf32, #tpu.memory_space<vmem>>, vector<1x8x128xf32>
    tpu.vector_store %arg6[%c0_19, %c0_20, %c0_21], %50 {strides = array<i32>} : memref<1x8x128xf32, #tpu.memory_space<vmem>>, vector<1x8x128xf32>,
    return
  }
  func.func @transform_0(%arg0: i32, %arg1: memref<8xi32, #tpu.memory_space<smem>>, %arg2: memref<8xi32, #tpu.memory_space<smem>>, %arg3: memref<8xi32, #tpu.memory_space<smem>>, %arg4: memref<1xi32, #tpu.memory_space<smem>>) -> (i32, i32) {
    %c0_i32 = arith.constant 0 : i32
    %c0_i32_0 = arith.constant 0 : i32
    %c0_i32_1 = arith.constant 0 : i32
    return %c0_i32, %c0_i32_0 : i32, i32
  }
  func.func @transform_1(%arg0: i32, %arg1: memref<8xi32, #tpu.memory_space<smem>>, %arg2: memref<8xi32, #tpu.memory_space<smem>>, %arg3: memref<8xi32, #tpu.memory_space<smem>>, %arg4: memref<1xi32, #tpu.memory_space<smem>>) -> (i32, i32, i32) {
    %c0_i32 = arith.constant 0 : i32
    %c0_i32_0 = arith.constant 0 : i32
    %c0_i32_1 = arith.constant 0 : i32
    return %arg0, %c0_i32, %c0_i32_0 : i32, i32, i32
  }
}

</mosaic_0001>

<llo_original>
// kernel: tpu_custom_call.1
$region0: #{tpu_custom_call.1}
  #allocation0 [shape = 'u32[]', space=smem, size = 0x4, offset = 0x4, fixed_abs, tag = 'smem constant byte address 0x4 - core index']
  #allocation1 [shape = 'u32[72,128]{1,0:T(1,128)}', space=vmem, size = 0x9000, scoped, tag = 'internal scratch']
  #allocation2 [shape = 'f32[8,128]{1,0:T(8,128)}', space=vmem, size = 0x1000, scoped, tag = 'scratch operand']
  #allocation3 [shape = 'f32[8,128]{1,0:T(8,128)}', space=vmem, size = 0x1000, scoped, tag = 'scratch operand']
  #allocation4 [shape = 'f32[8,128]{1,0:T(8,128)}', space=vmem, size = 0x1000, scoped, tag = 'scratch operand']
  #allocation5 [shape = 's32[1]{0}', space=sflag, size = 0x4, scoped, tag = 'scoped memory for tpu_custom_call.1']
  #allocation6 [shape = 'u8[512]{0}', space=smem, size = 0x200, scoped, tag = 'prefetched SMEM operand 0']
  #allocation7 [shape = 'u8[512]{0}', space=smem, size = 0x200, scoped, tag = 'prefetched SMEM operand 1']
  #allocation8 [shape = 'u8[512]{0}', space=smem, size = 0x200, scoped, tag = 'prefetched SMEM operand 2']
  #allocation9 [shape = 's32[1]{0:T(128)S(6)}', space=smem, size = 0x200, scoped, tag = 'prefetched SMEM operand 3']
  %s0 = inlined_call_operand.vmem [shape: s32[8], index: 0, kind: input, shape index: {}]
  %s1 = inlined_call_operand.vmem [shape: s32[8], index: 1, kind: input, shape index: {}]
  %s2 = inlined_call_operand.vmem [shape: s32[8], index: 2, kind: input, shape index: {}]
  %s3 = inlined_call_operand.<no memory space> [shape: s32[1], index: 3, kind: input, shape index: {}]
  %s4 = inlined_call_operand.hbm [shape: f32[32,128], index: 4, kind: input, shape index: {}]
  %s5 = inlined_call_operand.hbm [shape: f32[1,8,128], index: 5, kind: output, shape index: {}]
  %s6 = sld [smem:[#allocation0]]
  $region25: #{tpu_custom_call.1} parent=0
    _
  %s8 = ssub.s32 1, %s6
  %s9 = scalar_select 0, %s8, %s6
  %s11 = sshll.u32 %s0, 4
  %s12 = int_to_ptr.vmem [resolvable:$true] %s11
  %14 = dma.vmem_to_smem %s12, 16, [#allocation6], [#allocation5]
  %s16 = sshll.u32 %s1, 4
  %s17 = int_to_ptr.vmem [resolvable:$true] %s16
  %19 = dma.vmem_to_smem %s17, 16, [#allocation7], [#allocation5]
  %s21 = sshll.u32 %s2, 4
  %s22 = int_to_ptr.vmem [resolvable:$true] %s21
  %24 = dma.vmem_to_smem %s22, 16, [#allocation8], [#allocation5]
  %25 = sst [smem:[#allocation9]] %s3
  %27 = dma.done [#allocation5], 48
  %28 = sfence
  $region1: #{tpu_custom_call.1} parent=0
    #allocation10 [shape = 'u8[16384]{0}', space=vmem, size = 0x4000, scoped, tag = 'input window, operand 4, single buffered']
    #allocation11 [shape = 's32[1]{0}', space=sflag, size = 0x4, scoped, tag = 'scoped memory for tpu_custom_call.1']
    #allocation12 [shape = 's32[1]{0}', space=sflag, size = 0x4, scoped, tag = 'scoped memory for tpu_custom_call.1']
    #allocation13 [shape = 'u8[4096]{0}', space=vmem, size = 0x1000, scoped, tag = 'output window, operand 0, single buffered']
    %29 = vsyncpa [#allocation11], 0
    %30 = vsyncpa [#allocation12], 0
    // Predicated region
    $region2: #{tpu_custom_call.1} parent=1 // pred_check
      _
    $region3: #{tpu_custom_call.1} parent=1 // pred_check_branch
      %32 = sbr.rel (0) target = $region5
    $region4: #{tpu_custom_call.1} parent=1 // pred_region
      %34 = vsyncadd [#allocation11], 0
      %s35 = sshll.u32 %s4, 4
      %s36 = int_to_ptr.hbm [resolvable:$true] %s35
      %s37 = sshll.u32 [#allocation10], 4
      %s38 = int_to_ptr.vmem [resolvable:$true] %s37
      %43 = dma.hbm_to_vmem [thread:$0]  %s36, 512, %s38, [#allocation11], 128, 128, 8
    $region5: #{tpu_custom_call.1} parent=1 // pred_fallthru
      _
    // Predicated region
    $region6: #{tpu_custom_call.1} parent=1 // pred_check
      _
    $region7: #{tpu_custom_call.1} parent=1 // pred_check_branch
      %45 = sbr.rel (0) target = $region9
    $region8: #{tpu_custom_call.1} parent=1 // pred_region
      %47 = dma.done [#allocation11], 512
    $region9: #{tpu_custom_call.1} parent=1 // pred_fallthru
      _
    %s48 = smul.u32 0, 8
    %s49 = sld [smem:[#allocation9]]
    loop: start=0, step=1, limit=8
    $region10: #{tpu_custom_call.1} parent=1 // loop_pre_header
      _
    $region11: #{tpu_custom_call.1} parent=1 // loop_header
      %s51 = sphi 0, %s55
      %p52 = scmp.ge.s32.totalorder %s51, 8
    $region12: #{tpu_custom_call.1} parent=1 // loop_header_branch
      %54 = sbr.rel (%p52) target = $region16
    $region13: #{tpu_custom_call.1} parent=1 // loop_body
      %s56 = sadd.s32 %s48, %s51
      %s57 = sld [smem:[#allocation6 + %s56]]
      %s58 = scalar_lea.vmem [#allocation10], %s57
      %v59 = vld [vmem:[%s58] sm:$0x1]
      %s60 = scalar_lea.vmem [#allocation2], %s51
      %61 = vst [vmem:[%s60] sm:$0x1] %v59
      %s62 = sld [smem:[#allocation7 + %s56]]
      %s63 = scalar_lea.vmem [#allocation10], %s62
      %v64 = vld [vmem:[%s63] sm:$0x1]
      %s65 = scalar_lea.vmem [#allocation3], %s51
      %66 = vst [vmem:[%s65] sm:$0x1] %v64
      %s67 = sld [smem:[#allocation8 + %s56]]
      %s68 = scalar_lea.vmem [#allocation10], %s67
      %v69 = vld [vmem:[%s68] sm:$0x1]
      %s70 = scalar_lea.vmem [#allocation4], %s51
      %71 = vst [vmem:[%s70] sm:$0x1] %v69
    $region14: #{tpu_custom_call.1} parent=1 // loop_footer
      %s55 = sadd.s32 1, %s51
    $region15: #{tpu_custom_call.1} parent=1 // loop_footer_branch
      %50 = sbr.rel target = $region11
    $region16: #{tpu_custom_call.1} parent=1 // loop_exit
      _
    %v72 = vld [vmem:[#allocation2] sm:$0xff]
    %v73 = vld [vmem:[#allocation3] sm:$0xff]
    %v74 = vld [vmem:[#allocation4] sm:$0xff]
    %v75 = vmul.f32 %v72, %v72
    %76 = vadd.xlane.f32.xlu0 %v75
    %v77 = vpop.xlane.xlu0 %76
    %v78 = vmul.f32 %v73, %v73
    %79 = vadd.xlane.f32.xlu0 %v78
    %v80 = vpop.xlane.xlu0 %79
    %v81 = vmul.f32 %v74, %v74
    %82 = vadd.xlane.f32.xlu0 %v81
    %v83 = vpop.xlane.xlu0 %82
    %v84 = vmul.f32 %v72, %v73
    %85 = vadd.xlane.f32.xlu0 %v84
    %v86 = vpop.xlane.xlu0 %85
    %v87 = vmul.f32 %v72, %v74
    %88 = vadd.xlane.f32.xlu0 %v87
    %v89 = vpop.xlane.xlu0 %88
    %v90 = vrsqrt.pop %v77
    %v91 = vmul.f32 %v90, %v77
    %v92 = vmul.f32 %v91, %v90
    %v93 = vmul.f32 0.5, %v92
    %v94 = vsub.f32 1.5, %v93
    %v95 = vmul.f32 %v90, %v94
    %v96 = vmul.f32 %v77, %v95
    %vm97 = vcmp.eq.f32.partialorder %v77, inf
    %v98 = vsel %vm97, %v77, %v96
    %vm99 = vcmp.eq.f32.partialorder %v77, 0.0
    %v100 = vand.u32 %v77, 2147483648
    %v101 = vsel %vm99, %v100, %v98
    %v102 = vmax.f32 %v101, 1e-08
    %v103 = vrsqrt.pop %v80
    %v104 = vmul.f32 %v103, %v80
    %v105 = vmul.f32 %v104, %v103
    %v106 = vmul.f32 0.5, %v105
    %v107 = vsub.f32 1.5, %v106
    %v108 = vmul.f32 %v103, %v107
    %v109 = vmul.f32 %v80, %v108
    %vm110 = vcmp.eq.f32.partialorder %v80, inf
    %v111 = vsel %vm110, %v80, %v109
    %vm112 = vcmp.eq.f32.partialorder %v80, 0.0
    %v113 = vand.u32 %v80, 2147483648
    %v114 = vsel %vm112, %v113, %v111
    %v115 = vmax.f32 %v114, 1e-08
    %v116 = vrsqrt.pop %v83
    %v117 = vmul.f32 %v116, %v83
    %v118 = vmul.f32 %v117, %v116
    %v119 = vmul.f32 0.5, %v118
    %v120 = vsub.f32 1.5, %v119
    %v121 = vmul.f32 %v116, %v120
    %v122 = vmul.f32 %v83, %v121
    %vm123 = vcmp.eq.f32.partialorder %v83, inf
    %v124 = vsel %vm123, %v83, %v122
    %vm125 = vcmp.eq.f32.partialorder %v83, 0.0
    %v126 = vand.u32 %v83, 2147483648
    %v127 = vsel %vm125, %v126, %v124
    %v128 = vmax.f32 %v127, 1e-08
    %v129 = vmul.f32 %v102, %v115
    %v130 = vrcp.pop %v129
    %v131 = vmul.f32 %v129, %v130
    %v132 = vsub.f32 1.0, %v131
    %v133 = vmul.f32 %v130, %v132
    %v134 = vadd.f32 %v130, %v133
    %vm135 = vweird.f32 %v129
    %vm136 = vweird.f32 %v130
    %vm137 = vmor %vm135, %vm136
    %v138 = vsel %vm137, %v130, %v134
    %v139 = vand.u32 2147483647, %v129
    %vm140 = vcmp.eq.f32.partialorder %v139, 8.507059e+37
    %v141 = vand.u32 %v129, 2147483648
    %v142 = vor.u32 1.1754944e-38, %v141
    %v143 = vsel %vm140, %v142, %v138
    %v144 = vmul.f32 %v86, %v143
    %v145 = vmul.f32 %v102, %v128
    %v146 = vrcp.pop %v145
    %v147 = vmul.f32 %v145, %v146
    %v148 = vsub.f32 1.0, %v147
    %v149 = vmul.f32 %v146, %v148
    %v150 = vadd.f32 %v146, %v149
    %vm151 = vweird.f32 %v145
    %vm152 = vweird.f32 %v146
    %vm153 = vmor %vm151, %vm152
    %v154 = vsel %vm153, %v146, %v150
    %v155 = vand.u32 2147483647, %v145
    %vm156 = vcmp.eq.f32.partialorder %v155, 8.507059e+37
    %v157 = vand.u32 %v145, 2147483648
    %v158 = vor.u32 1.1754944e-38, %v157
    %v159 = vsel %vm156, %v158, %v154
    %v160 = vmul.f32 %v89, %v159
    %v161 = vsub.f32 %v160, %v144
    %v162 = vadd.f32 %v161, 0.5
    %v163 = vmax.f32 %v162, 0.0
    %v164 = vlaneseq
    %v165 = vshrl.u32 %v164, 7
    %v166 = vstv %s48
    %v167 = vadd.s32 %v166, %v165
    %v168 = vstv %s49
    %vm169 = vcmp.lt.s32.totalorder %v167, %v168
    %v170 = vsel %vm169, %v163, 0.0
    %vm171 = vcmask 7168
    %v172 = vsel %vm171, %v170, 0.0
    %173 = vadd.xlane.f32.xlu0 %v172
    %v174 = vpop.xlane.xlu0 %173
    %v175 = vrot.slane %v174, 4
    %v176 = vadd.f32 %v174, %v175
    %v177 = vrot.slane %v176, 2
    %v178 = vadd.f32 %v176, %v177
    %v179 = vrot.slane %v178, 1
    %v180 = vadd.f32 %v178, %v179
    %s181 = vtos %v180
    %v182 = vstv %s181
    %183 = vst [vmem:[#allocation13] sm:$0xff] %v182
    // Predicated region
    $region17: #{tpu_custom_call.1} parent=1 // pred_check
      _
    $region18: #{tpu_custom_call.1} parent=1 // pred_check_branch
      %185 = sbr.rel (0) target = $region20
    $region19: #{tpu_custom_call.1} parent=1 // pred_region
      %187 = vsyncadd [#allocation12], 0
      %s189 = sshll.u32 [#allocation13], 4
      %s190 = int_to_ptr.vmem [resolvable:$true] %s189
      %s191 = sshll.u32 %s5, 4
      %s192 = int_to_ptr.hbm [resolvable:$true] %s191
      %194 = dma.vmem_to_hbm [thread:$0]  %s190, 128, %s192, [#allocation12]
    $region20: #{tpu_custom_call.1} parent=1 // pred_fallthru
      _
    // Predicated region
    $region21: #{tpu_custom_call.1} parent=1 // pred_check
      _
    $region22: #{tpu_custom_call.1} parent=1 // pred_check_branch
      %196 = sbr.rel (0) target = $region24
    $region23: #{tpu_custom_call.1} parent=1 // pred_region
      %198 = dma.done [#allocation12], 128
    $region24: #{tpu_custom_call.1} parent=1 // pred_fallthru
      _
    %199 = vsyncpa [#allocation11], 1
    %200 = vsyncpa [#allocation12], 1

</llo_original>
